<compile_context>
chip_gen: v5e
topology: v5e:2x2
jax: 0.10.0
libtpu: 0.0.40
codegen_flags: <defaults>
</compile_context>

<pallas_src>
import functools

import jax
import jax.numpy as jnp
from jax import lax
from jax.experimental import pallas as pl
from jax.experimental.pallas import tpu as pltpu


# ---------------------------------------------------------------------------
# Fused kernel: one batch element per grid step.
# ---------------------------------------------------------------------------
def _stride_block_kernel(x00_ref, x01_ref, x10_ref, x11_ref, w_ref, b_ref,
                         o_ref, *, C, F, Ho, Wo, mxu_dtype):
    """InstanceNorm + Hardswish + (3x3 s2 conv + 1x1 s2 skip conv) for one image.

    x{rc}_ref: (1, C, Ho*Wo) f32 phase r/c of the input:  x[c, 2a+r, 2b+c]
    w_ref:     (10, F, C)     per-tap weights: taps 0..8 = w3[:,:,kh,kw], 9 = w1
    b_ref:     (F, 1) f32     combined bias b3 + b1
    o_ref:     (1, F, Ho*Wo)  f32 output (NCHW after wrapper reshape)
    """
    HW = Ho * Wo
    inv_n = 1.0 / (4.0 * HW)           # full spatial plane has H*W = 4*Ho*Wo px
    eps = 1e-5

    p00 = x00_ref[0]                   # (C, HW) f32; raw p00 also feeds the skip
    p01 = x01_ref[0]
    p10 = x10_ref[0]
    p11 = x11_ref[0]

    # ---- single-pass InstanceNorm2d statistics (biased variance) ------------
    s = (jnp.sum(p00, axis=-1, keepdims=True)
         + jnp.sum(p01, axis=-1, keepdims=True)
         + jnp.sum(p10, axis=-1, keepdims=True)
         + jnp.sum(p11, axis=-1, keepdims=True))
    ss = (jnp.sum(p00 * p00, axis=-1, keepdims=True)
          + jnp.sum(p01 * p01, axis=-1, keepdims=True)
          + jnp.sum(p10 * p10, axis=-1, keepdims=True)
          + jnp.sum(p11 * p11, axis=-1, keepdims=True))
    mean = s * inv_n                                     # (C, 1)
    var = ss * inv_n - mean * mean
    rstd = lax.rsqrt(var + eps)

    def norm_act(p):                                     # InstanceNorm + Hardswish
        y = (p - mean) * rstd
        return y * jnp.clip(y + 3.0, 0.0, 6.0) * (1.0 / 6.0)

    y00, y01, y10, y11 = norm_act(p00), norm_act(p01), norm_act(p10), norm_act(p11)

    # ---- shifted-phase views implementing pad=1 of the 3x3 stride-2 conv ----
    lane = lax.broadcasted_iota(jnp.int32, (C, HW), 1)   # flattened (ho*Wo + wo)
    first_row = lane < Wo                                # output row ho == 0
    first_col = (lane % Wo) == 0                         # output col wo == 0

    def shifted(p, dr, dc):
        # z[c, ho*Wo + wo] = p[c, (ho-dr)*Wo + (wo-dc)], zero outside the image.
        amt = dr * Wo + dc
        z = p
        if amt:
            z = jnp.concatenate(
                [jnp.zeros((C, amt), p.dtype), p[:, :HW - amt]], axis=1)
        if dr:
            z = jnp.where(first_row, 0.0, z)
        if dc:
            z = jnp.where(first_col, 0.0, z)
        return z

    # tap t = kh*3 + kw -> (phase, row-shift, col-shift); tap 9 = raw 1x1 skip.
    taps = (
        (y11, 1, 1), (y10, 1, 0), (y11, 1, 0),
        (y01, 0, 1), (y00, 0, 0), (y01, 0, 0),
        (y11, 0, 1), (y10, 0, 0), (y11, 0, 0),
        (p00, 0, 0),
    )

    # Bias folded into the accumulator init; f32 accumulation on the MXU.
    acc = jnp.broadcast_to(b_ref[...], (F, HW)).astype(jnp.float32)
    for t, (p, dr, dc) in enumerate(taps):
        a = shifted(p, dr, dc).astype(mxu_dtype)         # (C, HW)
        acc = acc + jnp.dot(w_ref[t], a, preferred_element_type=jnp.float32)

    o_ref[0] = acc.astype(o_ref.dtype)


# ---------------------------------------------------------------------------
# Wrapper: polyphase split of x (the only wrapper-side data movement, ~|x|),
# weight/bias packing, pallas_call with a real grid over the batch axis.
# ---------------------------------------------------------------------------
def stride_block_forward(x, w3, b3, w1, b1, *, use_bf16_mxu=False):
    x = x.astype(jnp.float32)
    N, C, H, W = x.shape
    F = w3.shape[0]
    if H % 2 or W % 2:
        # TODO(synk): odd spatial sizes need an extra boundary phase; not implemented.
        raise NotImplementedError("stride_block_forward assumes even H and W")
    Ho, Wo = H // 2, W // 2
    HW = Ho * Wo

    # polyphase decomposition: p_rc[n, c, a*Wo+b] = x[n, c, 2a+r, 2b+c]
    phases = [x[:, :, r::2, s::2].reshape(N, C, HW)
              for r in (0, 1) for s in (0, 1)]

    mxu_dtype = jnp.bfloat16 if use_bf16_mxu else jnp.float32
    # stacked per-tap weights: taps 0..8 = w3[:, :, kh, kw], tap 9 = w1.
    w_taps = jnp.stack(
        [w3[:, :, kh, kw] for kh in range(3) for kw in range(3)]
        + [w1[:, :, 0, 0]], axis=0).astype(mxu_dtype)          # (10, F, C)
    bias = (b3 + b1).reshape(F, 1).astype(jnp.float32)

    kernel = functools.partial(
        _stride_block_kernel, C=C, F=F, Ho=Ho, Wo=Wo, mxu_dtype=mxu_dtype)

    phase_spec = pl.BlockSpec((1, C, HW), lambda n: (n, 0, 0))
    out = pl.pallas_call(
        kernel,
        out_shape=jax.ShapeDtypeStruct((N, F, HW), jnp.float32),
        grid=(N,),
        in_specs=[phase_spec, phase_spec, phase_spec, phase_spec,
                  pl.BlockSpec((10, F, C), lambda n: (0, 0, 0)),
                  pl.BlockSpec((F, 1), lambda n: (0, 0))],
        out_specs=pl.BlockSpec((1, F, HW), lambda n: (n, 0, 0)),
        compiler_params=pltpu.CompilerParams(
            dimension_semantics=("parallel",),
            vmem_limit_bytes=48 * 1024 * 1024),
    )(*phases, w_taps, bias)

    return out.reshape(N, F, Ho, Wo)                     # already NCHW


# ---------------------------------------------------------------------------
# Pure-JAX reference for validation.
# ---------------------------------------------------------------------------
def stride_block_reference(x, w3, b3, w1, b1):
    x = x.astype(jnp.float32)
    mean = jnp.mean(x, axis=(2, 3), keepdims=True)
    var = jnp.var(x, axis=(2, 3), keepdims=True)
    y = (x - mean) * lax.rsqrt(var + 1e-5)
    y = y * jnp.clip(y + 3.0, 0.0, 6.0) / 6.0
    dn = ("NCHW", "OIHW", "NCHW")
    c3 = lax.conv_general_dilated(y, w3, (2, 2), ((1, 1), (1, 1)),
                                  dimension_numbers=dn) + b3[None, :, None, None]
    c1 = lax.conv_general_dilated(x, w1, (2, 2), ((0, 0), (0, 0)),
                                  dimension_numbers=dn) + b1[None, :, None, None]
    return c3 + c1


if __name__ == "__main__":
    # Small deterministic config: batch=2, filtIn=4, filtOut=8, spatial=16, kernel=3
    N, C, F, H, W = 2, 4, 8, 16, 16
    key = jax.random.PRNGKey(0)
    kx, k3w, k3b, k1w, k1b = jax.random.split(key, 5)

    x = jax.random.normal(kx, (N, C, H, W), dtype=jnp.float32)
    w3 = jax.random.normal(k3w, (F, C, 3, 3), dtype=jnp.float32) * 0.1
    b3 = jax.random.normal(k3b, (F,), dtype=jnp.float32) * 0.1
    w1 = jax.random.normal(k1w, (F, C, 1, 1), dtype=jnp.float32) * 0.1
    b1 = jax.random.normal(k1b, (F,), dtype=jnp.float32) * 0.1

    ref = stride_block_reference(x, w3, b3, w1, b1)

    # Exact path (f32 MXU operands) -- matches PyTorch semantics.
    fwd_f32 = jax.jit(functools.partial(stride_block_forward, use_bf16_mxu=False))
    out = jax.block_until_ready(fwd_f32(x, w3, b3, w1, b1))
    assert out.shape == (N, F, H // 2, W // 2), out.shape
    assert jnp.allclose(out, ref, atol=1e-4, rtol=1e-4), \
        float(jnp.max(jnp.abs(out - ref)))

    # bf16 MXU-operand path (f32 accumulation) -- v6e/v7x throughput option.
    fwd_bf16 = jax.jit(functools.partial(stride_block_forward, use_bf16_mxu=True))
    out_bf16 = jax.block_until_ready(fwd_bf16(x, w3, b3, w1, b1))
    assert jnp.allclose(out_bf16, ref, atol=5e-2, rtol=5e-2), \
        float(jnp.max(jnp.abs(out_bf16 - ref)))

    # TODO(synk): norm='weight' (weight_norm + ReLU) branch and kernel=5 path are
    # not implemented; this covers the norm='instance'/'batch' + Hardswish + k=3
    # configuration of the module.
    print("KERNEL_OK")
</pallas_src>

<mosaic_0001>
module attributes {stable_mosaic.version = 11 : i64} {
  func.func @_stride_block_kernel(%arg0: i32, %arg1: memref<1x4x64xf32, #tpu.memory_space<vmem>>, %arg2: memref<1x4x64xf32, #tpu.memory_space<vmem>>, %arg3: memref<1x4x64xf32, #tpu.memory_space<vmem>>, %arg4: memref<1x4x64xf32, #tpu.memory_space<vmem>>, %arg5: memref<10x8x4xf32, #tpu.memory_space<vmem>>, %arg6: memref<8x1xf32, #tpu.memory_space<vmem>>, %arg7: memref<1x8x64xf32, #tpu.memory_space<vmem>>) attributes {dimension_semantics = [#tpu.dimension_semantics<parallel>], iteration_bounds = array<i64: 2>, scalar_prefetch = 0 : i64, scratch_operands = 0 : i64, tpu.core_type = #tpu.core_type<tc>, window_params = [{transform_indices = @transform_0, window_bounds = array<i64: 1, 4, 64>}, {transform_indices = @transform_1, window_bounds = array<i64: 1, 4, 64>}, {transform_indices = @transform_2, window_bounds = array<i64: 1, 4, 64>}, {transform_indices = @transform_3, window_bounds = array<i64: 1, 4, 64>}, {pipeline_mode = #tpu.pipeline_mode<synchronous>, transform_indices = @transform_4, window_bounds = array<i64: 10, 8, 4>}, {pipeline_mode = #tpu.pipeline_mode<synchronous>, transform_indices = @transform_5, window_bounds = array<i64: 8, 1>}, {transform_indices = @transform_6, window_bounds = array<i64: 1, 8, 64>}]} {
    %c0 = arith.constant 0 : index
    %c0_0 = arith.constant 0 : index
    %c0_1 = arith.constant 0 : index
    %0 = vector.load %arg1[%c0, %c0_0, %c0_1] : memref<1x4x64xf32, #tpu.memory_space<vmem>>, vector<1x4x64xf32>
    %1 = vector.shape_cast %0 : vector<1x4x64xf32> to vector<4x64xf32>
    %c0_2 = arith.constant 0 : index
    %c0_3 = arith.constant 0 : index
    %c0_4 = arith.constant 0 : index
    %2 = vector.load %arg2[%c0_2, %c0_3, %c0_4] : memref<1x4x64xf32, #tpu.memory_space<vmem>>, vector<1x4x64xf32>
    %3 = vector.shape_cast %2 : vector<1x4x64xf32> to vector<4x64xf32>
    %c0_5 = arith.constant 0 : index
    %c0_6 = arith.constant 0 : index
    %c0_7 = arith.constant 0 : index
    %4 = vector.load %arg3[%c0_5, %c0_6, %c0_7] : memref<1x4x64xf32, #tpu.memory_space<vmem>>, vector<1x4x64xf32>
    %5 = vector.shape_cast %4 : vector<1x4x64xf32> to vector<4x64xf32>
    %c0_8 = arith.constant 0 : index
    %c0_9 = arith.constant 0 : index
    %c0_10 = arith.constant 0 : index
    %6 = vector.load %arg4[%c0_8, %c0_9, %c0_10] : memref<1x4x64xf32, #tpu.memory_space<vmem>>, vector<1x4x64xf32>
    %7 = vector.shape_cast %6 : vector<1x4x64xf32> to vector<4x64xf32>
    %cst = arith.constant dense<0.000000e+00> : vector<4xf32>
    %8 = vector.multi_reduction <add>, %1, %cst [1] : vector<4x64xf32> to vector<4xf32>
    %9 = vector.shape_cast %8 : vector<4xf32> to vector<4x1xf32>
    %cst_11 = arith.constant dense<0.000000e+00> : vector<4xf32>
    %10 = vector.multi_reduction <add>, %3, %cst_11 [1] : vector<4x64xf32> to vector<4xf32>
    %11 = vector.shape_cast %10 : vector<4xf32> to vector<4x1xf32>
    %12 = arith.addf %9, %11 : vector<4x1xf32>
    %cst_12 = arith.constant dense<0.000000e+00> : vector<4xf32>
    %13 = vector.multi_reduction <add>, %5, %cst_12 [1] : vector<4x64xf32> to vector<4xf32>
    %14 = vector.shape_cast %13 : vector<4xf32> to vector<4x1xf32>
    %15 = arith.addf %12, %14 : vector<4x1xf32>
    %cst_13 = arith.constant dense<0.000000e+00> : vector<4xf32>
    %16 = vector.multi_reduction <add>, %7, %cst_13 [1] : vector<4x64xf32> to vector<4xf32>
    %17 = vector.shape_cast %16 : vector<4xf32> to vector<4x1xf32>
    %18 = arith.addf %15, %17 : vector<4x1xf32>
    %19 = arith.mulf %1, %1 : vector<4x64xf32>
    %cst_14 = arith.constant dense<0.000000e+00> : vector<4xf32>
    %20 = vector.multi_reduction <add>, %19, %cst_14 [1] : vector<4x64xf32> to vector<4xf32>
    %21 = vector.shape_cast %20 : vector<4xf32> to vector<4x1xf32>
    %22 = arith.mulf %3, %3 : vector<4x64xf32>
    %cst_15 = arith.constant dense<0.000000e+00> : vector<4xf32>
    %23 = vector.multi_reduction <add>, %22, %cst_15 [1] : vector<4x64xf32> to vector<4xf32>
    %24 = vector.shape_cast %23 : vector<4xf32> to vector<4x1xf32>
    %25 = arith.addf %21, %24 : vector<4x1xf32>
    %26 = arith.mulf %5, %5 : vector<4x64xf32>
    %cst_16 = arith.constant dense<0.000000e+00> : vector<4xf32>
    %27 = vector.multi_reduction <add>, %26, %cst_16 [1] : vector<4x64xf32> to vector<4xf32>
    %28 = vector.shape_cast %27 : vector<4xf32> to vector<4x1xf32>
    %29 = arith.addf %25, %28 : vector<4x1xf32>
    %30 = arith.mulf %7, %7 : vector<4x64xf32>
    %cst_17 = arith.constant dense<0.000000e+00> : vector<4xf32>
    %31 = vector.multi_reduction <add>, %30, %cst_17 [1] : vector<4x64xf32> to vector<4xf32>
    %32 = vector.shape_cast %31 : vector<4xf32> to vector<4x1xf32>
    %33 = arith.addf %29, %32 : vector<4x1xf32>
    %cst_18 = arith.constant 3.906250e-03 : f32
    %34 = vector.broadcast %cst_18 : f32 to vector<4x1xf32>
    %35 = arith.mulf %18, %34 : vector<4x1xf32>
    %cst_19 = arith.constant 3.906250e-03 : f32
    %36 = vector.broadcast %cst_19 : f32 to vector<4x1xf32>
    %37 = arith.mulf %33, %36 : vector<4x1xf32>
    %38 = arith.mulf %35, %35 : vector<4x1xf32>
    %39 = arith.subf %37, %38 : vector<4x1xf32>
    %cst_20 = arith.constant 9.99999974E-6 : f32
    %40 = vector.broadcast %cst_20 : f32 to vector<4x1xf32>
    %41 = arith.addf %39, %40 : vector<4x1xf32>
    %42 = math.rsqrt %41 : vector<4x1xf32>
    %43 = vector.broadcast %35 : vector<4x1xf32> to vector<4x64xf32>
    %44 = arith.subf %1, %43 : vector<4x64xf32>
    %45 = vector.broadcast %42 : vector<4x1xf32> to vector<4x64xf32>
    %46 = arith.mulf %44, %45 : vector<4x64xf32>
    %cst_21 = arith.constant 3.000000e+00 : f32
    %47 = vector.broadcast %cst_21 : f32 to vector<4x64xf32>
    %48 = arith.addf %46, %47 : vector<4x64xf32>
    %cst_22 = arith.constant 0.000000e+00 : f32
    %cst_23 = arith.constant 6.000000e+00 : f32
    %49 = vector.broadcast %cst_22 : f32 to vector<4x64xf32>
    %50 = arith.maximumf %49, %48 : vector<4x64xf32>
    %51 = vector.broadcast %cst_23 : f32 to vector<4x64xf32>
    %52 = arith.minimumf %51, %50 : vector<4x64xf32>
    %53 = arith.mulf %46, %52 : vector<4x64xf32>
    %cst_24 = arith.constant 0.166666672 : f32
    %54 = vector.broadcast %cst_24 : f32 to vector<4x64xf32>
    %55 = arith.mulf %53, %54 : vector<4x64xf32>
    %56 = vector.broadcast %35 : vector<4x1xf32> to vector<4x64xf32>
    %57 = arith.subf %3, %56 : vector<4x64xf32>
    %58 = vector.broadcast %42 : vector<4x1xf32> to vector<4x64xf32>
    %59 = arith.mulf %57, %58 : vector<4x64xf32>
    %cst_25 = arith.constant 3.000000e+00 : f32
    %60 = vector.broadcast %cst_25 : f32 to vector<4x64xf32>
    %61 = arith.addf %59, %60 : vector<4x64xf32>
    %cst_26 = arith.constant 0.000000e+00 : f32
    %cst_27 = arith.constant 6.000000e+00 : f32
    %62 = vector.broadcast %cst_26 : f32 to vector<4x64xf32>
    %63 = arith.maximumf %62, %61 : vector<4x64xf32>
    %64 = vector.broadcast %cst_27 : f32 to vector<4x64xf32>
    %65 = arith.minimumf %64, %63 : vector<4x64xf32>
    %66 = arith.mulf %59, %65 : vector<4x64xf32>
    %cst_28 = arith.constant 0.166666672 : f32
    %67 = vector.broadcast %cst_28 : f32 to vector<4x64xf32>
    %68 = arith.mulf %66, %67 : vector<4x64xf32>
    %69 = vector.broadcast %35 : vector<4x1xf32> to vector<4x64xf32>
    %70 = arith.subf %5, %69 : vector<4x64xf32>
    %71 = vector.broadcast %42 : vector<4x1xf32> to vector<4x64xf32>
    %72 = arith.mulf %70, %71 : vector<4x64xf32>
    %cst_29 = arith.constant 3.000000e+00 : f32
    %73 = vector.broadcast %cst_29 : f32 to vector<4x64xf32>
    %74 = arith.addf %72, %73 : vector<4x64xf32>
    %cst_30 = arith.constant 0.000000e+00 : f32
    %cst_31 = arith.constant 6.000000e+00 : f32
    %75 = vector.broadcast %cst_30 : f32 to vector<4x64xf32>
    %76 = arith.maximumf %75, %74 : vector<4x64xf32>
    %77 = vector.broadcast %cst_31 : f32 to vector<4x64xf32>
    %78 = arith.minimumf %77, %76 : vector<4x64xf32>
    %79 = arith.mulf %72, %78 : vector<4x64xf32>
    %cst_32 = arith.constant 0.166666672 : f32
    %80 = vector.broadcast %cst_32 : f32 to vector<4x64xf32>
    %81 = arith.mulf %79, %80 : vector<4x64xf32>
    %82 = vector.broadcast %35 : vector<4x1xf32> to vector<4x64xf32>
    %83 = arith.subf %7, %82 : vector<4x64xf32>
    %84 = vector.broadcast %42 : vector<4x1xf32> to vector<4x64xf32>
    %85 = arith.mulf %83, %84 : vector<4x64xf32>
    %cst_33 = arith.constant 3.000000e+00 : f32
    %86 = vector.broadcast %cst_33 : f32 to vector<4x64xf32>
    %87 = arith.addf %85, %86 : vector<4x64xf32>
    %cst_34 = arith.constant 0.000000e+00 : f32
    %cst_35 = arith.constant 6.000000e+00 : f32
    %88 = vector.broadcast %cst_34 : f32 to vector<4x64xf32>
    %89 = arith.maximumf %88, %87 : vector<4x64xf32>
    %90 = vector.broadcast %cst_35 : f32 to vector<4x64xf32>
    %91 = arith.minimumf %90, %89 : vector<4x64xf32>
    %92 = arith.mulf %85, %91 : vector<4x64xf32>
    %cst_36 = arith.constant 0.166666672 : f32
    %93 = vector.broadcast %cst_36 : f32 to vector<4x64xf32>
    %94 = arith.mulf %92, %93 : vector<4x64xf32>
    %95 = tpu.iota {dimensions = array<i32: 1>} : vector<4x64xi32>
    %c8_i32 = arith.constant 8 : i32
    %96 = vector.broadcast %c8_i32 : i32 to vector<4x64xi32>
    %97 = arith.cmpi slt, %95, %96 : vector<4x64xi32>
    %c8_i32_37 = arith.constant 8 : i32
    %c0_i32 = arith.constant 0 : i32
    %98 = arith.cmpi eq, %c8_i32_37, %c0_i32 : i32
    %c1_i32 = arith.constant 1 : i32
    %99 = arith.select %98, %c1_i32, %c8_i32_37 : i32
    %100 = vector.broadcast %99 : i32 to vector<4x64xi32>
    %101 = arith.remsi %95, %100 : vector<4x64xi32>
    %c0_i32_38 = arith.constant 0 : i32
    %102 = vector.broadcast %c0_i32_38 : i32 to vector<4x64xi32>
    %103 = arith.cmpi ne, %101, %102 : vector<4x64xi32>
    %c0_i32_39 = arith.constant 0 : i32
    %104 = vector.broadcast %c0_i32_39 : i32 to vector<4x64xi32>
    %105 = arith.cmpi slt, %101, %104 : vector<4x64xi32>
    %c0_i32_40 = arith.constant 0 : i32
    %106 = arith.cmpi slt, %99, %c0_i32_40 : i32
    %107 = vector.broadcast %106 : i1 to vector<4x64xi1>
    %108 = vector.broadcast %107 : vector<4x64xi1> to vector<4x64xi1>
    %109 = arith.xori %105, %108 : vector<4x64xi1>
    %110 = arith.andi %109, %103 : vector<4x64xi1>
    %111 = vector.broadcast %99 : i32 to vector<4x64xi32>
    %112 = arith.addi %101, %111 : vector<4x64xi32>
    %113 = arith.select %110, %112, %101 : vector<4x64xi1>, vector<4x64xi32>
    %c0_i32_41 = arith.constant 0 : i32
    %114 = vector.broadcast %c0_i32_41 : i32 to vector<4x64xi32>
    %115 = arith.cmpi eq, %113, %114 : vector<4x64xi32>
    %c0_42 = arith.constant 0 : index
    %c0_43 = arith.constant 0 : index
    %116 = vector.load %arg6[%c0_42, %c0_43] : memref<8x1xf32, #tpu.memory_space<vmem>>, vector<8x1xf32>
    %117 = vector.shape_cast %116 : vector<8x1xf32> to vector<8x1xf32>
    %118 = vector.broadcast %117 : vector<8x1xf32> to vector<8x64xf32>
    %cst_44 = arith.constant 0.000000e+00 : f32
    %119 = vector.broadcast %cst_44 : f32 to vector<4x9xf32>
    %120 = vector.extract_strided_slice %94 {offsets = [0, 0], sizes = [4, 55], strides = [1, 1]} : vector<4x64xf32> to vector<4x55xf32>
    %121 = tpu.concatenate %119, %120 in 1 : vector<4x9xf32>, vector<4x55xf32> -> vector<4x64xf32>
    %cst_45 = arith.constant 0.000000e+00 : f32
    %122 = vector.broadcast %cst_45 : f32 to vector<4x64xf32>
    %123 = arith.select %97, %122, %121 : vector<4x64xi1>, vector<4x64xf32>
    %cst_46 = arith.constant 0.000000e+00 : f32
    %124 = vector.broadcast %cst_46 : f32 to vector<4x64xf32>
    %125 = arith.select %115, %124, %123 : vector<4x64xi1>, vector<4x64xf32>
    %c0_47 = arith.constant 0 : index
    %c0_48 = arith.constant 0 : index
    %c0_49 = arith.constant 0 : index
    %126 = vector.load %arg5[%c0_47, %c0_48, %c0_49] : memref<10x8x4xf32, #tpu.memory_space<vmem>>, vector<1x8x4xf32>
    %127 = vector.shape_cast %126 : vector<1x8x4xf32> to vector<8x4xf32>
    %cst_50 = arith.constant dense<0.000000e+00> : vector<8x64xf32>
    %128 = tpu.matmul %127, %125, %cst_50 {dimension_numbers = #tpu.dot_dimension_numbers<[1], [0], [0], [1], [0, 0, 1, 1], [], []>} : vector<8x4xf32>, vector<4x64xf32>, vector<8x64xf32> -> vector<8x64xf32>
    %129 = arith.addf %118, %128 : vector<8x64xf32>
    %cst_51 = arith.constant 0.000000e+00 : f32
    %130 = vector.broadcast %cst_51 : f32 to vector<4x8xf32>
    %131 = vector.extract_strided_slice %81 {offsets = [0, 0], sizes = [4, 56], strides = [1, 1]} : vector<4x64xf32> to vector<4x56xf32>
    %132 = tpu.concatenate %130, %131 in 1 : vector<4x8xf32>, vector<4x56xf32> -> vector<4x64xf32>
    %cst_52 = arith.constant 0.000000e+00 : f32
    %133 = vector.broadcast %cst_52 : f32 to vector<4x64xf32>
    %134 = arith.select %97, %133, %132 : vector<4x64xi1>, vector<4x64xf32>
    %c1 = arith.constant 1 : index
    %c0_53 = arith.constant 0 : index
    %c0_54 = arith.constant 0 : index
    %135 = vector.load %arg5[%c1, %c0_53, %c0_54] : memref<10x8x4xf32, #tpu.memory_space<vmem>>, vector<1x8x4xf32>
    %136 = vector.shape_cast %135 : vector<1x8x4xf32> to vector<8x4xf32>
    %cst_55 = arith.constant dense<0.000000e+00> : vector<8x64xf32>
    %137 = tpu.matmul %136, %134, %cst_55 {dimension_numbers = #tpu.dot_dimension_numbers<[1], [0], [0], [1], [0, 0, 1, 1], [], []>} : vector<8x4xf32>, vector<4x64xf32>, vector<8x64xf32> -> vector<8x64xf32>
    %138 = arith.addf %129, %137 : vector<8x64xf32>
    %cst_56 = arith.constant 0.000000e+00 : f32
    %139 = vector.broadcast %cst_56 : f32 to vector<4x8xf32>
    %140 = vector.extract_strided_slice %94 {offsets = [0, 0], sizes = [4, 56], strides = [1, 1]} : vector<4x64xf32> to vector<4x56xf32>
    %141 = tpu.concatenate %139, %140 in 1 : vector<4x8xf32>, vector<4x56xf32> -> vector<4x64xf32>
    %cst_57 = arith.constant 0.000000e+00 : f32
    %142 = vector.broadcast %cst_57 : f32 to vector<4x64xf32>
    %143 = arith.select %97, %142, %141 : vector<4x64xi1>, vector<4x64xf32>
    %c2 = arith.constant 2 : index
    %c0_58 = arith.constant 0 : index
    %c0_59 = arith.constant 0 : index
    %144 = vector.load %arg5[%c2, %c0_58, %c0_59] : memref<10x8x4xf32, #tpu.memory_space<vmem>>, vector<1x8x4xf32>
    %145 = vector.shape_cast %144 : vector<1x8x4xf32> to vector<8x4xf32>
    %cst_60 = arith.constant dense<0.000000e+00> : vector<8x64xf32>
    %146 = tpu.matmul %145, %143, %cst_60 {dimension_numbers = #tpu.dot_dimension_numbers<[1], [0], [0], [1], [0, 0, 1, 1], [], []>} : vector<8x4xf32>, vector<4x64xf32>, vector<8x64xf32> -> vector<8x64xf32>
    %147 = arith.addf %138, %146 : vector<8x64xf32>
    %cst_61 = arith.constant 0.000000e+00 : f32
    %148 = vector.broadcast %cst_61 : f32 to vector<4x1xf32>
    %149 = vector.extract_strided_slice %68 {offsets = [0, 0], sizes = [4, 63], strides = [1, 1]} : vector<4x64xf32> to vector<4x63xf32>
    %150 = tpu.concatenate %148, %149 in 1 : vector<4x1xf32>, vector<4x63xf32> -> vector<4x64xf32>
    %cst_62 = arith.constant 0.000000e+00 : f32
    %151 = vector.broadcast %cst_62 : f32 to vector<4x64xf32>
    %152 = arith.select %115, %151, %150 : vector<4x64xi1>, vector<4x64xf32>
    %c3 = arith.constant 3 : index
    %c0_63 = arith.constant 0 : index
    %c0_64 = arith.constant 0 : index
    %153 = vector.load %arg5[%c3, %c0_63, %c0_64] : memref<10x8x4xf32, #tpu.memory_space<vmem>>, vector<1x8x4xf32>
    %154 = vector.shape_cast %153 : vector<1x8x4xf32> to vector<8x4xf32>
    %cst_65 = arith.constant dense<0.000000e+00> : vector<8x64xf32>
    %155 = tpu.matmul %154, %152, %cst_65 {dimension_numbers = #tpu.dot_dimension_numbers<[1], [0], [0], [1], [0, 0, 1, 1], [], []>} : vector<8x4xf32>, vector<4x64xf32>, vector<8x64xf32> -> vector<8x64xf32>
    %156 = arith.addf %147, %155 : vector<8x64xf32>
    %c4 = arith.constant 4 : index
    %c0_66 = arith.constant 0 : index
    %c0_67 = arith.constant 0 : index
    %157 = vector.load %arg5[%c4, %c0_66, %c0_67] : memref<10x8x4xf32, #tpu.memory_space<vmem>>, vector<1x8x4xf32>
    %158 = vector.shape_cast %157 : vector<1x8x4xf32> to vector<8x4xf32>
    %cst_68 = arith.constant dense<0.000000e+00> : vector<8x64xf32>
    %159 = tpu.matmul %158, %55, %cst_68 {dimension_numbers = #tpu.dot_dimension_numbers<[1], [0], [0], [1], [0, 0, 1, 1], [], []>} : vector<8x4xf32>, vector<4x64xf32>, vector<8x64xf32> -> vector<8x64xf32>
    %160 = arith.addf %156, %159 : vector<8x64xf32>
    %c5 = arith.constant 5 : index
    %c0_69 = arith.constant 0 : index
    %c0_70 = arith.constant 0 : index
    %161 = vector.load %arg5[%c5, %c0_69, %c0_70] : memref<10x8x4xf32, #tpu.memory_space<vmem>>, vector<1x8x4xf32>
    %162 = vector.shape_cast %161 : vector<1x8x4xf32> to vector<8x4xf32>
    %cst_71 = arith.constant dense<0.000000e+00> : vector<8x64xf32>
    %163 = tpu.matmul %162, %68, %cst_71 {dimension_numbers = #tpu.dot_dimension_numbers<[1], [0], [0], [1], [0, 0, 1, 1], [], []>} : vector<8x4xf32>, vector<4x64xf32>, vector<8x64xf32> -> vector<8x64xf32>
    %164 = arith.addf %160, %163 : vector<8x64xf32>
    %cst_72 = arith.constant 0.000000e+00 : f32
    %165 = vector.broadcast %cst_72 : f32 to vector<4x1xf32>
    %166 = vector.extract_strided_slice %94 {offsets = [0, 0], sizes = [4, 63], strides = [1, 1]} : vector<4x64xf32> to vector<4x63xf32>
    %167 = tpu.concatenate %165, %166 in 1 : vector<4x1xf32>, vector<4x63xf32> -> vector<4x64xf32>
    %cst_73 = arith.constant 0.000000e+00 : f32
    %168 = vector.broadcast %cst_73 : f32 to vector<4x64xf32>
    %169 = arith.select %115, %168, %167 : vector<4x64xi1>, vector<4x64xf32>
    %c6 = arith.constant 6 : index
    %c0_74 = arith.constant 0 : index
    %c0_75 = arith.constant 0 : index
    %170 = vector.load %arg5[%c6, %c0_74, %c0_75] : memref<10x8x4xf32, #tpu.memory_space<vmem>>, vector<1x8x4xf32>
    %171 = vector.shape_cast %170 : vector<1x8x4xf32> to vector<8x4xf32>
    %cst_76 = arith.constant dense<0.000000e+00> : vector<8x64xf32>
    %172 = tpu.matmul %171, %169, %cst_76 {dimension_numbers = #tpu.dot_dimension_numbers<[1], [0], [0], [1], [0, 0, 1, 1], [], []>} : vector<8x4xf32>, vector<4x64xf32>, vector<8x64xf32> -> vector<8x64xf32>
    %173 = arith.addf %164, %172 : vector<8x64xf32>
    %c7 = arith.constant 7 : index
    %c0_77 = arith.constant 0 : index
    %c0_78 = arith.constant 0 : index
    %174 = vector.load %arg5[%c7, %c0_77, %c0_78] : memref<10x8x4xf32, #tpu.memory_space<vmem>>, vector<1x8x4xf32>
    %175 = vector.shape_cast %174 : vector<1x8x4xf32> to vector<8x4xf32>
    %cst_79 = arith.constant dense<0.000000e+00> : vector<8x64xf32>
    %176 = tpu.matmul %175, %81, %cst_79 {dimension_numbers = #tpu.dot_dimension_numbers<[1], [0], [0], [1], [0, 0, 1, 1], [], []>} : vector<8x4xf32>, vector<4x64xf32>, vector<8x64xf32> -> vector<8x64xf32>
    %177 = arith.addf %173, %176 : vector<8x64xf32>
    %c8 = arith.constant 8 : index
    %c0_80 = arith.constant 0 : index
    %c0_81 = arith.constant 0 : index
    %178 = vector.load %arg5[%c8, %c0_80, %c0_81] : memref<10x8x4xf32, #tpu.memory_space<vmem>>, vector<1x8x4xf32>
    %179 = vector.shape_cast %178 : vector<1x8x4xf32> to vector<8x4xf32>
    %cst_82 = arith.constant dense<0.000000e+00> : vector<8x64xf32>
    %180 = tpu.matmul %179, %94, %cst_82 {dimension_numbers = #tpu.dot_dimension_numbers<[1], [0], [0], [1], [0, 0, 1, 1], [], []>} : vector<8x4xf32>, vector<4x64xf32>, vector<8x64xf32> -> vector<8x64xf32>
    %181 = arith.addf %177, %180 : vector<8x64xf32>
    %c9 = arith.constant 9 : index
    %c0_83 = arith.constant 0 : index
    %c0_84 = arith.constant 0 : index
    %182 = vector.load %arg5[%c9, %c0_83, %c0_84] : memref<10x8x4xf32, #tpu.memory_space<vmem>>, vector<1x8x4xf32>
    %183 = vector.shape_cast %182 : vector<1x8x4xf32> to vector<8x4xf32>
    %cst_85 = arith.constant dense<0.000000e+00> : vector<8x64xf32>
    %184 = tpu.matmul %183, %1, %cst_85 {dimension_numbers = #tpu.dot_dimension_numbers<[1], [0], [0], [1], [0, 0, 1, 1], [], []>} : vector<8x4xf32>, vector<4x64xf32>, vector<8x64xf32> -> vector<8x64xf32>
    %185 = arith.addf %181, %184 : vector<8x64xf32>
    %c0_86 = arith.constant 0 : index
    %c0_87 = arith.constant 0 : index
    %c0_88 = arith.constant 0 : index
    %186 = vector.load %arg7[%c0_86, %c0_87, %c0_88] : memref<1x8x64xf32, #tpu.memory_space<vmem>>, vector<1x8x64xf32>
    %187 = vector.shape_cast %186 : vector<1x8x64xf32> to vector<8x64xf32>
    %188 = vector.shape_cast %185 : vector<8x64xf32> to vector<1x8x64xf32>
    tpu.vector_store %arg7[%c0_86, %c0_87, %c0_88], %188 {strides = array<i32>} : memref<1x8x64xf32, #tpu.memory_space<vmem>>, vector<1x8x64xf32>,
    return
  }
  func.func @transform_0(%arg0: i32) -> (i32, i32, i32) {
    %c0_i32 = arith.constant 0 : i32
    %c0_i32_0 = arith.constant 0 : i32
    %c0_i32_1 = arith.constant 0 : i32
    return %arg0, %c0_i32, %c0_i32_0 : i32, i32, i32
  }
  func.func @transform_1(%arg0: i32) -> (i32, i32, i32) {
    %c0_i32 = arith.constant 0 : i32
    %c0_i32_0 = arith.constant 0 : i32
    %c0_i32_1 = arith.constant 0 : i32
    return %arg0, %c0_i32, %c0_i32_0 : i32, i32, i32
  }
  func.func @transform_2(%arg0: i32) -> (i32, i32, i32) {
    %c0_i32 = arith.constant 0 : i32
    %c0_i32_0 = arith.constant 0 : i32
    %c0_i32_1 = arith.constant 0 : i32
    return %arg0, %c0_i32, %c0_i32_0 : i32, i32, i32
  }
  func.func @transform_3(%arg0: i32) -> (i32, i32, i32) {
    %c0_i32 = arith.constant 0 : i32
    %c0_i32_0 = arith.constant 0 : i32
    %c0_i32_1 = arith.constant 0 : i32
    return %arg0, %c0_i32, %c0_i32_0 : i32, i32, i32
  }
  func.func @transform_4(%arg0: i32) -> (i32, i32, i32) {
    %c0_i32 = arith.constant 0 : i32
    %c0_i32_0 = arith.constant 0 : i32
    %c0_i32_1 = arith.constant 0 : i32
    %c0_i32_2 = arith.constant 0 : i32
    return %c0_i32, %c0_i32_0, %c0_i32_1 : i32, i32, i32
  }
  func.func @transform_5(%arg0: i32) -> (i32, i32) {
    %c0_i32 = arith.constant 0 : i32
    %c0_i32_0 = arith.constant 0 : i32
    %c0_i32_1 = arith.constant 0 : i32
    return %c0_i32, %c0_i32_0 : i32, i32
  }
  func.func @transform_6(%arg0: i32) -> (i32, i32, i32) {
    %c0_i32 = arith.constant 0 : i32
    %c0_i32_0 = arith.constant 0 : i32
    %c0_i32_1 = arith.constant 0 : i32
    return %arg0, %c0_i32, %c0_i32_0 : i32, i32, i32
  }
}

</mosaic_0001>

<llo_original>
// kernel: stride_block_forward.1
$region0: #{stride_block_forward.1}
  #allocation0 [shape = 'u32[]', space=smem, size = 0x4, offset = 0x4, fixed_abs, tag = 'smem constant byte address 0x4 - core index']
  #allocation1 [shape = 'u32[72,128]{1,0:T(1,128)}', space=vmem, size = 0x9000, scoped, tag = 'internal scratch']
  %s0 = inlined_call_operand.vmem [shape: f32[2,4,64], index: 0, kind: input, shape index: {}]
  %s1 = inlined_call_operand.vmem [shape: f32[2,4,64], index: 1, kind: input, shape index: {}]
  %s2 = inlined_call_operand.vmem [shape: f32[2,4,64], index: 2, kind: input, shape index: {}]
  %s3 = inlined_call_operand.vmem [shape: f32[2,4,64], index: 3, kind: input, shape index: {}]
  %s4 = inlined_call_operand.vmem [shape: f32[10,8,4], index: 4, kind: input, shape index: {}]
  %s5 = inlined_call_operand.vmem [shape: f32[8,1], index: 5, kind: input, shape index: {}]
  %s6 = inlined_call_operand.vmem [shape: f32[2,8,64], index: 6, kind: output, shape index: {}]
  %s7 = sld [smem:[#allocation0]]
  $region57: #{stride_block_forward.1} parent=0
    _
  %s9 = ssub.s32 1, %s7
  %s10 = scalar_select 0, %s9, %s7
  loop: start=0, step=1, limit=4
  $region2: #{stride_block_forward.1} parent=0 // loop_pre_header
    _
  $region3: #{stride_block_forward.1} parent=0 // loop_header
    %s12 = sphi 0, %s16
    %p13 = scmp.ge.s32.totalorder %s12, 4
    %s22 = sphi 0, %s24
    %s25 = sphi 0, %s22
    %s26 = sphi 0, %s25
    %s42 = sphi 0, %s26
    %s48 = sphi 0, %s50
    %s51 = sphi 0, %s48
    %s52 = sphi 0, %s51
    %s68 = sphi 0, %s52
    %s74 = sphi 0, %s76
    %s77 = sphi 0, %s74
    %s78 = sphi 0, %s77
    %s94 = sphi 0, %s78
    %s100 = sphi 0, %s102
    %s103 = sphi 0, %s100
    %s104 = sphi 0, %s103
    %s120 = sphi 0, %s104
    %s124 = sphi 0, %s124
    %s126 = sphi 0, %s124
    %s127 = sphi 0, %s126
    %s141 = sphi 0, %s127
    %s145 = sphi 0, %s145
    %s147 = sphi 0, %s145
    %s148 = sphi 0, %s147
    %s162 = sphi 0, %s148
    %s168 = sphi 0, %s170
    %s171 = sphi 0, %s168
    %s172 = sphi 0, %s171
    %s188 = sphi 0, %s172
  $region4: #{stride_block_forward.1} parent=0 // loop_header_branch
    %15 = sbr.rel (%p13) target = $region8
  $region5: #{stride_block_forward.1} parent=0 // loop_body
    %s17 = ssub.s32 %s12, 1
    %s18 = ssub.s32 %s12, 2
    %s19 = sadd.s32 %s12, 1
    %s20 = ssub.s32 %s12, %s19
    %p21 = scmp.eq.s32.totalorder %s20, 0
    %s23 = sadd.s32 %s22, 1
    %s24 = scalar_select %p21, %s22, %s23
    %p27 = pneg %p21
    %p28 = scmp.eq.s32.totalorder %s12, 1
    %p29 = por %p27, %p28
    %p30 = scmp.ne.s32.totalorder %s22, %s25
    %p31 = scmp.eq.s32.totalorder %s12, 0
    %p32 = por %p30, %p31
    %p33 = scmp.ne.s32.totalorder %s22, %s25
    %p34 = scmp.eq.s32.totalorder %s17, 1
    %p35 = por %p33, %p34
    %p36 = scmp.ne.s32.totalorder %s25, %s26
    %p37 = scmp.eq.s32.totalorder %s17, 0
    %p38 = por %p36, %p37
    %p39 = scmp.ne.s32.totalorder %s25, %s26
    %p40 = scmp.eq.s32.totalorder %s18, 1
    %p41 = por %p39, %p40
    %p43 = scmp.ne.s32.totalorder %s26, %s42
    %p44 = scmp.eq.s32.totalorder %s18, 0
    %p45 = por %p43, %p44
    %s46 = ssub.s32 %s12, %s19
    %p47 = scmp.eq.s32.totalorder %s46, 0
    %s49 = sadd.s32 %s48, 1
    %s50 = scalar_select %p47, %s48, %s49
    %p53 = pneg %p47
    %p54 = scmp.eq.s32.totalorder %s12, 1
    %p55 = por %p53, %p54
    %p56 = scmp.ne.s32.totalorder %s48, %s51
    %p57 = scmp.eq.s32.totalorder %s12, 0
    %p58 = por %p56, %p57
    %p59 = scmp.ne.s32.totalorder %s48, %s51
    %p60 = scmp.eq.s32.totalorder %s17, 1
    %p61 = por %p59, %p60
    %p62 = scmp.ne.s32.totalorder %s51, %s52
    %p63 = scmp.eq.s32.totalorder %s17, 0
    %p64 = por %p62, %p63
    %p65 = scmp.ne.s32.totalorder %s51, %s52
    %p66 = scmp.eq.s32.totalorder %s18, 1
    %p67 = por %p65, %p66
    %p69 = scmp.ne.s32.totalorder %s52, %s68
    %p70 = scmp.eq.s32.totalorder %s18, 0
    %p71 = por %p69, %p70
    %s72 = ssub.s32 %s12, %s19
    %p73 = scmp.eq.s32.totalorder %s72, 0
    %s75 = sadd.s32 %s74, 1
    %s76 = scalar_select %p73, %s74, %s75
    %p79 = pneg %p73
    %p80 = scmp.eq.s32.totalorder %s12, 1
    %p81 = por %p79, %p80
    %p82 = scmp.ne.s32.totalorder %s74, %s77
    %p83 = scmp.eq.s32.totalorder %s12, 0
    %p84 = por %p82, %p83
    %p85 = scmp.ne.s32.totalorder %s74, %s77
    %p86 = scmp.eq.s32.totalorder %s17, 1
    %p87 = por %p85, %p86
    %p88 = scmp.ne.s32.totalorder %s77, %s78
    %p89 = scmp.eq.s32.totalorder %s17, 0
    %p90 = por %p88, %p89
    %p91 = scmp.ne.s32.totalorder %s77, %s78
    %p92 = scmp.eq.s32.totalorder %s18, 1
    %p93 = por %p91, %p92
    %p95 = scmp.ne.s32.totalorder %s78, %s94
    %p96 = scmp.eq.s32.totalorder %s18, 0
    %p97 = por %p95, %p96
    %s98 = ssub.s32 %s12, %s19
    %p99 = scmp.eq.s32.totalorder %s98, 0
    %s101 = sadd.s32 %s100, 1
    %s102 = scalar_select %p99, %s100, %s101
    %p105 = pneg %p99
    %p106 = scmp.eq.s32.totalorder %s12, 1
    %p107 = por %p105, %p106
    %p108 = scmp.ne.s32.totalorder %s100, %s103
    %p109 = scmp.eq.s32.totalorder %s12, 0
    %p110 = por %p108, %p109
    %p111 = scmp.ne.s32.totalorder %s100, %s103
    %p112 = scmp.eq.s32.totalorder %s17, 1
    %p113 = por %p111, %p112
    %p114 = scmp.ne.s32.totalorder %s103, %s104
    %p115 = scmp.eq.s32.totalorder %s17, 0
    %p116 = por %p114, %p115
    %p117 = scmp.ne.s32.totalorder %s103, %s104
    %p118 = scmp.eq.s32.totalorder %s18, 1
    %p119 = por %p117, %p118
    %p121 = scmp.ne.s32.totalorder %s104, %s120
    %p122 = scmp.eq.s32.totalorder %s18, 0
    %p123 = por %p121, %p122
    %s125 = sadd.s32 %s124, 1
    %p128 = scmp.eq.s32.totalorder %s12, 1
    %p129 = scmp.ne.s32.totalorder %s124, %s126
    %p130 = scmp.eq.s32.totalorder %s12, 0
    %p131 = por %p129, %p130
    %p132 = scmp.ne.s32.totalorder %s124, %s126
    %p133 = scmp.eq.s32.totalorder %s17, 1
    %p134 = por %p132, %p133
    %p135 = scmp.ne.s32.totalorder %s126, %s127
    %p136 = scmp.eq.s32.totalorder %s17, 0
    %p137 = por %p135, %p136
    %p138 = scmp.ne.s32.totalorder %s126, %s127
    %p139 = scmp.eq.s32.totalorder %s18, 1
    %p140 = por %p138, %p139
    %p142 = scmp.ne.s32.totalorder %s127, %s141
    %p143 = scmp.eq.s32.totalorder %s18, 0
    %p144 = por %p142, %p143
    %s146 = sadd.s32 %s145, 1
    %p149 = scmp.eq.s32.totalorder %s12, 1
    %p150 = scmp.ne.s32.totalorder %s145, %s147
    %p151 = scmp.eq.s32.totalorder %s12, 0
    %p152 = por %p150, %p151
    %p153 = scmp.ne.s32.totalorder %s145, %s147
    %p154 = scmp.eq.s32.totalorder %s17, 1
    %p155 = por %p153, %p154
    %p156 = scmp.ne.s32.totalorder %s147, %s148
    %p157 = scmp.eq.s32.totalorder %s17, 0
    %p158 = por %p156, %p157
    %p159 = scmp.ne.s32.totalorder %s147, %s148
    %p160 = scmp.eq.s32.totalorder %s18, 1
    %p161 = por %p159, %p160
    %p163 = scmp.ne.s32.totalorder %s148, %s162
    %p164 = scmp.eq.s32.totalorder %s18, 0
    %p165 = por %p163, %p164
    %s166 = ssub.s32 %s12, %s19
    %p167 = scmp.eq.s32.totalorder %s166, 0
    %s169 = sadd.s32 %s168, 1
    %s170 = scalar_select %p167, %s168, %s169
    %p173 = pneg %p167
    %p174 = scmp.eq.s32.totalorder %s12, 1
    %p175 = por %p173, %p174
    %p176 = scmp.ne.s32.totalorder %s168, %s171
    %p177 = scmp.eq.s32.totalorder %s12, 0
    %p178 = por %p176, %p177
    %p179 = scmp.ne.s32.totalorder %s168, %s171
    %p180 = scmp.eq.s32.totalorder %s17, 1
    %p181 = por %p179, %p180
    %p182 = scmp.ne.s32.totalorder %s171, %s172
    %p183 = scmp.eq.s32.totalorder %s17, 0
    %p184 = por %p182, %p183
    %p185 = scmp.ne.s32.totalorder %s171, %s172
    %p186 = scmp.eq.s32.totalorder %s18, 1
    %p187 = por %p185, %p186
    %p189 = scmp.ne.s32.totalorder %s172, %s188
    %p190 = scmp.eq.s32.totalorder %s18, 0
    %p191 = por %p189, %p190
    %p192 = scmp.le.s32.totalorder 1, %s12
    %p193 = scmp.lt.s32.totalorder %s12, 3
    %p194 = pnand %p192, %p193
    %p195 = pneg %p194
    // Predicated region
    $region9: #{stride_block_forward.1} parent=5 // pred_check
      _
    $region10: #{stride_block_forward.1} parent=5 // pred_check_branch
      %197 = sbr.rel (%p194) target = $region12
    $region11: #{stride_block_forward.1} parent=5 // pred_region
      %s198 = ssub.s32 %s12, 1
      // Predicated region
      $region13: #{stride_block_forward.1} parent=11 // pred_check
        %p199 = pneg %p137
      $region14: #{stride_block_forward.1} parent=11 // pred_check_branch
        %201 = sbr.rel (%p199) target = $region16
      $region15: #{stride_block_forward.1} parent=11 // pred_region
        _
      $region16: #{stride_block_forward.1} parent=11 // pred_fallthru
        _
      // Predicated region
      $region17: #{stride_block_forward.1} parent=11 // pred_check
        %p202 = pneg %p158
      $region18: #{stride_block_forward.1} parent=11 // pred_check_branch
        %204 = sbr.rel (%p202) target = $region20
      $region19: #{stride_block_forward.1} parent=11 // pred_region
        _
      $region20: #{stride_block_forward.1} parent=11 // pred_fallthru
        _
    $region12: #{stride_block_forward.1} parent=5 // pred_fallthru
      _
    %p205 = scmp.lt.s32.totalorder %s12, 2
    // Predicated region
    $region21: #{stride_block_forward.1} parent=5 // pred_check
      %p206 = pneg %p205
    $region22: #{stride_block_forward.1} parent=5 // pred_check_branch
      %208 = sbr.rel (%p206) target = $region24
    $region23: #{stride_block_forward.1} parent=5 // pred_region
      // Predicated region
      $region25: #{stride_block_forward.1} parent=23 // pred_check
        %p209 = pneg %p32
      $region26: #{stride_block_forward.1} parent=23 // pred_check_branch
        %211 = sbr.rel (%p209) target = $region28
      $region27: #{stride_block_forward.1} parent=23 // pred_region
        %p212 = scmp.lt.s32.totalorder %s12, 1
        %s213 = scalar_select %p212, %s12, 1
        %s214 = smul.addr %s213, 4
        %s215 = scalar_lea.vmem %s0, %s214
      $region28: #{stride_block_forward.1} parent=23 // pred_fallthru
        _
      // Predicated region
      $region29: #{stride_block_forward.1} parent=23 // pred_check
        %p216 = pneg %p58
      $region30: #{stride_block_forward.1} parent=23 // pred_check_branch
        %218 = sbr.rel (%p216) target = $region32
      $region31: #{stride_block_forward.1} parent=23 // pred_region
        %p219 = scmp.lt.s32.totalorder %s12, 1
        %s220 = scalar_select %p219, %s12, 1
        %s221 = smul.addr %s220, 4
        %s222 = scalar_lea.vmem %s1, %s221
      $region32: #{stride_block_forward.1} parent=23 // pred_fallthru
        _
      // Predicated region
      $region33: #{stride_block_forward.1} parent=23 // pred_check
        %p223 = pneg %p84
      $region34: #{stride_block_forward.1} parent=23 // pred_check_branch
        %225 = sbr.rel (%p223) target = $region36
      $region35: #{stride_block_forward.1} parent=23 // pred_region
        %p226 = scmp.lt.s32.totalorder %s12, 1
        %s227 = scalar_select %p226, %s12, 1
        %s228 = smul.addr %s227, 4
        %s229 = scalar_lea.vmem %s2, %s228
      $region36: #{stride_block_forward.1} parent=23 // pred_fallthru
        _
      // Predicated region
      $region37: #{stride_block_forward.1} parent=23 // pred_check
        %p230 = pneg %p110
      $region38: #{stride_block_forward.1} parent=23 // pred_check_branch
        %232 = sbr.rel (%p230) target = $region40
      $region39: #{stride_block_forward.1} parent=23 // pred_region
        %p233 = scmp.lt.s32.totalorder %s12, 1
        %s234 = scalar_select %p233, %s12, 1
        %s235 = smul.addr %s234, 4
        %s236 = scalar_lea.vmem %s3, %s235
      $region40: #{stride_block_forward.1} parent=23 // pred_fallthru
        _
    $region24: #{stride_block_forward.1} parent=5 // pred_fallthru
      _
    %p237 = scmp.le.s32.totalorder 1, %s12
    %p238 = scmp.lt.s32.totalorder %s12, 3
    %p239 = pnand %p237, %p238
    %p240 = pneg %p239
    // Predicated region
    $region41: #{stride_block_forward.1} parent=5 // pred_check
      _
    $region42: #{stride_block_forward.1} parent=5 // pred_check_branch
      %242 = sbr.rel (%p239) target = $region44
    $region43: #{stride_block_forward.1} parent=5 // pred_region
      %s243 = ssub.s32 %s12, 1
      %p244 = scmp.lt.s32.totalorder %s17, 1
      %s245 = scalar_select %p244, %s17, 1
      %s246 = smul.addr %s245, 4
      %s247 = scalar_lea.vmem %s0, %s246
      %p248 = pneg %p38
      %p249 = pneg %p35
      %p250 = scmp.lt.s32.totalorder %s17, 1
      %s251 = scalar_select %p250, %s17, 1
      %s252 = smul.addr %s251, 4
      %s253 = scalar_lea.vmem %s1, %s252
      %p254 = pneg %p64
      %p255 = pneg %p61
      %p256 = scmp.lt.s32.totalorder %s17, 1
      %s257 = scalar_select %p256, %s17, 1
      %s258 = smul.addr %s257, 4
      %s259 = scalar_lea.vmem %s2, %s258
      %p260 = pneg %p90
      %p261 = pneg %p87
      %p262 = scmp.lt.s32.totalorder %s17, 1
      %s263 = scalar_select %p262, %s17, 1
      %s264 = smul.addr %s263, 4
      %s265 = scalar_lea.vmem %s3, %s264
      %p266 = pneg %p116
      %p267 = pneg %p113
      %p268 = pneg %p137
      %p269 = pneg %p134
      %p270 = pneg %p158
      %p271 = pneg %p155
      %p272 = pneg %p184
      %p273 = pneg %p181
      %p274 = scmp.lt.s32.totalorder %s17, 1
      %s275 = scalar_select %p274, %s17, 1
      %s276 = smul.addr %s275, 8
      %s277 = scalar_lea.vmem %s6, %s276
      %p278 = scmp.lt.s32.totalorder %s17, 1
      %s279 = scalar_select %p278, %s17, 1
      %s280 = smul.addr %s279, 4
      %s281 = scalar_lea.vmem %s0, %s280
      %p282 = scmp.lt.s32.totalorder %s17, 1
      %s283 = scalar_select %p282, %s17, 1
      %s284 = smul.addr %s283, 4
      %s285 = scalar_lea.vmem %s1, %s284
      %p286 = scmp.lt.s32.totalorder %s17, 1
      %s287 = scalar_select %p286, %s17, 1
      %s288 = smul.addr %s287, 4
      %s289 = scalar_lea.vmem %s2, %s288
      %p290 = scmp.lt.s32.totalorder %s17, 1
      %s291 = scalar_select %p290, %s17, 1
      %s292 = smul.addr %s291, 4
      %s293 = scalar_lea.vmem %s3, %s292
      %p294 = scmp.lt.s32.totalorder %s17, 1
      %s295 = scalar_select %p294, %s17, 1
      %s296 = smul.addr %s295, 8
      %s297 = scalar_lea.vmem %s6, %s296
      %v298 = vld [vmem:[%s281] sm:$0xf]
      %v299 = vld [vmem:[%s285] sm:$0xf]
      %v300 = vld [vmem:[%s289] sm:$0xf]
      %v301 = vld [vmem:[%s293] sm:$0xf]
      %vm302 = vcmask 519168
      %v303 = vsel %vm302, %v298, 0.0
      %304 = vadd.xlane.f32.xlu0 %v303
      %v305 = vpop.xlane.xlu0 %304
      %v306 = vsel %vm302, %v299, 0.0
      %307 = vadd.xlane.f32.xlu0 %v306
      %v308 = vpop.xlane.xlu0 %307
      %v309 = vadd.f32 %v305, %v308
      %v310 = vsel %vm302, %v300, 0.0
      %311 = vadd.xlane.f32.xlu0 %v310
      %v312 = vpop.xlane.xlu0 %311
      %v313 = vadd.f32 %v309, %v312
      %v314 = vsel %vm302, %v301, 0.0
      %315 = vadd.xlane.f32.xlu0 %v314
      %v316 = vpop.xlane.xlu0 %315
      %v317 = vadd.f32 %v313, %v316
      %v318 = vmul.f32 %v298, %v298
      %v319 = vsel %vm302, %v318, 0.0
      %320 = vadd.xlane.f32.xlu0 %v319
      %v321 = vpop.xlane.xlu0 %320
      %v322 = vmul.f32 %v299, %v299
      %v323 = vsel %vm302, %v322, 0.0
      %324 = vadd.xlane.f32.xlu0 %v323
      %v325 = vpop.xlane.xlu0 %324
      %v326 = vadd.f32 %v321, %v325
      %v327 = vmul.f32 %v300, %v300
      %v328 = vsel %vm302, %v327, 0.0
      %329 = vadd.xlane.f32.xlu0 %v328
      %v330 = vpop.xlane.xlu0 %329
      %v331 = vadd.f32 %v326, %v330
      %v332 = vmul.f32 %v301, %v301
      %v333 = vsel %vm302, %v332, 0.0
      %334 = vadd.xlane.f32.xlu0 %v333
      %v335 = vpop.xlane.xlu0 %334
      %v336 = vadd.f32 %v331, %v335
      %v337 = vmul.f32 %v317, 0.00390625
      %v338 = vmul.f32 %v336, 0.00390625
      %v339 = vmul.f32 %v337, %v337
      %v340 = vsub.f32 %v338, %v339
      %v341 = vadd.f32 %v340, 1e-05
      %v342 = vrsqrt.pop %v341
      %v343 = vmul.f32 %v342, %v341
      %v344 = vmul.f32 %v343, %v342
      %v345 = vmul.f32 0.5, %v344
      %v346 = vsub.f32 1.5, %v345
      %v347 = vmul.f32 %v342, %v346
      %vm348 = vweird.f32 %v341
      %vm349 = vweird.f32 %v342
      %vm350 = vmor %vm348, %vm349
      %v351 = vsel %vm350, %v342, %v347
      %v352 = vsub.f32 %v298, %v337
      %v353 = vmul.f32 %v352, %v351
      %v354 = vadd.f32 %v353, 3.0
      %v355 = vmax.f32 %v354, 0.0
      %v356 = vmin.f32 %v355, 6.0
      %v357 = vmul.f32 %v353, %v356
      %v358 = vmul.f32 %v357, 0.16666667
      %v359 = vsub.f32 %v299, %v337
      %v360 = vmul.f32 %v359, %v351
      %v361 = vadd.f32 %v360, 3.0
      %v362 = vmax.f32 %v361, 0.0
      %v363 = vmin.f32 %v362, 6.0
      %v364 = vmul.f32 %v360, %v363
      %v365 = vmul.f32 %v364, 0.16666667
      %v366 = vsub.f32 %v300, %v337
      %v367 = vmul.f32 %v366, %v351
      %v368 = vadd.f32 %v367, 3.0
      %v369 = vmax.f32 %v368, 0.0
      %v370 = vmin.f32 %v369, 6.0
      %v371 = vmul.f32 %v367, %v370
      %v372 = vmul.f32 %v371, 0.16666667
      %v373 = vsub.f32 %v301, %v337
      %v374 = vmul.f32 %v373, %v351
      %v375 = vadd.f32 %v374, 3.0
      %v376 = vmax.f32 %v375, 0.0
      %v377 = vmin.f32 %v376, 6.0
      %v378 = vmul.f32 %v374, %v377
      %v379 = vmul.f32 %v378, 0.16666667
      %v380 = vlaneseq
      %v381 = vand.u32 %v380, 127
      %vm382 = vcmp.lt.s32.totalorder %v381, 8
      %vm383 = vcmp.lt.s32.totalorder %v381, 0
      %v384 = vsub.s32 0, %v381
      %v385 = vsel %vm383, %v384, %v381
      %v386 = vshrl.u32 %v385, 3
      %v387 = vand.u32 %v385, 7
      %v388 = vsub.s32 0, %v387
      %v389 = vsel %vm383, %v388, %v387
      %vm390 = vcmp.ne.s32.totalorder %v389, 0
      %vm391 = vcmp.lt.s32.totalorder %v389, 0
      %vm392 = vmand %vm391, %vm390
      %v393 = vadd.s32 %v389, 8
      %v394 = vsel %vm392, %v393, %v389
      %vm395 = vcmp.eq.s32.totalorder %v394, 0
      %v396 = vld [vmem:[%s5] sm:$0xff]
      %398 = vset.pattern.permute.xlu0 0
      %399 = vperm.xlu0 %398, %v396
      %v400 = vpop.permute.xlu0 %399
      %403 = vrot.lane.b32.xlu0 %v379, 9
      %v404 = vpop.permute.xlu0 %403
      %vm406 = vcmask 72704
      %v407 = vsel %vm406, 0.0, %v404
      %v408 = vsel %vm382, 0.0, %v407
      %v409 = vsel %vm395, 0.0, %v408
      %v410 = vld [vmem:[%s4] sm:$0xff]
      %vm411 = vcmask 31744
      %v413 = vsel %vm411, %v410, 0
      %vm415 = vcmask 1043456
      %v417 = vsel %vm415, %v409, 0
      %419 = vmatpush.msra.mxu0 0.0
      %420 = vmatpush.msra.mxu0 0.0
      %421 = vmatpush.msra.mxu0 0.0
      %422 = vmatpush.msra.mxu0 0.0
      %423 = vmatpush.msra.mxu0 0.0
      %424 = vmatpush.msra.mxu0 0.0
      %425 = vmatpush.msra.mxu0 0.0
      %426 = vmatpush.msra.mxu0 0.0
      %427 = vmatpush.msra.mxu0 0.0
      %428 = vmatpush.msra.mxu0 0.0
      %429 = vmatpush.msra.mxu0 0.0
      %430 = vmatpush.msra.mxu0 0.0
      %431 = vmatpush.msra.mxu0 0.0
      %432 = vmatpush.msra.mxu0 0.0
      %433 = vmatpush.msra.mxu0 0.0
      %434 = vmatpush.msra.mxu0 %v417
      %435 = vmatmul.f32.gmra.mxu0 %v413
      %v436 = vpop.f32.mrf.mxu0
      %v437 = vadd.f32 0.0, %v436
      %438 = vdwg.mxu0
      %v439 = vadd.f32 %v400, %v437
      %441 = vrot.lane.b32.xlu0 %v372, 8
      %v442 = vpop.permute.xlu0 %441
      %vm444 = vcmask 64512
      %v445 = vsel %vm444, 0.0, %v442
      %v446 = vsel %vm382, 0.0, %v445
      %s447 = scalar_lea.vmem %s4, 8
      %v448 = vld [vmem:[%s447] sm:$0xff]
      %v450 = vsel %vm411, %v448, 0
      %v453 = vsel %vm415, %v446, 0
      %455 = vmatpush.msra.mxu0 0.0
      %456 = vmatpush.msra.mxu0 0.0
      %457 = vmatpush.msra.mxu0 0.0
      %458 = vmatpush.msra.mxu0 0.0
      %459 = vmatpush.msra.mxu0 0.0
      %460 = vmatpush.msra.mxu0 0.0
      %461 = vmatpush.msra.mxu0 0.0
      %462 = vmatpush.msra.mxu0 0.0
      %463 = vmatpush.msra.mxu0 0.0
      %464 = vmatpush.msra.mxu0 0.0
      %465 = vmatpush.msra.mxu0 0.0
      %466 = vmatpush.msra.mxu0 0.0
      %467 = vmatpush.msra.mxu0 0.0
      %468 = vmatpush.msra.mxu0 0.0
      %469 = vmatpush.msra.mxu0 0.0
      %470 = vmatpush.msra.mxu0 %v453
      %471 = vmatmul.f32.gmra.mxu0 %v450
      %v472 = vpop.f32.mrf.mxu0
      %v473 = vadd.f32 0.0, %v472
      %474 = vdwg.mxu0
      %v475 = vadd.f32 %v439, %v473
      %476 = vrot.lane.b32.xlu0 %v379, 8
      %v477 = vpop.permute.xlu0 %476
      %v479 = vsel %vm444, 0.0, %v477
      %v480 = vsel %vm382, 0.0, %v479
      %s481 = scalar_lea.vmem %s4, 16
      %v482 = vld [vmem:[%s481] sm:$0xff]
      %v484 = vsel %vm411, %v482, 0
      %v487 = vsel %vm415, %v480, 0
      %489 = vmatpush.msra.mxu0 0.0
      %490 = vmatpush.msra.mxu0 0.0
      %491 = vmatpush.msra.mxu0 0.0
      %492 = vmatpush.msra.mxu0 0.0
      %493 = vmatpush.msra.mxu0 0.0
      %494 = vmatpush.msra.mxu0 0.0
      %495 = vmatpush.msra.mxu0 0.0
      %496 = vmatpush.msra.mxu0 0.0
      %497 = vmatpush.msra.mxu0 0.0
      %498 = vmatpush.msra.mxu0 0.0
      %499 = vmatpush.msra.mxu0 0.0
      %500 = vmatpush.msra.mxu0 0.0
      %501 = vmatpush.msra.mxu0 0.0
      %502 = vmatpush.msra.mxu0 0.0
      %503 = vmatpush.msra.mxu0 0.0
      %504 = vmatpush.msra.mxu0 %v487
      %505 = vmatmul.f32.gmra.mxu0 %v484
      %v506 = vpop.f32.mrf.mxu0
      %v507 = vadd.f32 0.0, %v506
      %508 = vdwg.mxu0
      %v509 = vadd.f32 %v475, %v507
      %511 = vrot.lane.b32.xlu0 %v365, 1
      %v512 = vpop.permute.xlu0 %511
      %vm514 = vcmask 7168
      %v515 = vsel %vm514, 0.0, %v512
      %v516 = vsel %vm395, 0.0, %v515
      %s517 = scalar_lea.vmem %s4, 24
      %v518 = vld [vmem:[%s517] sm:$0xff]
      %v520 = vsel %vm411, %v518, 0
      %v523 = vsel %vm415, %v516, 0
      %525 = vmatpush.msra.mxu0 0.0
      %526 = vmatpush.msra.mxu0 0.0
      %527 = vmatpush.msra.mxu0 0.0
      %528 = vmatpush.msra.mxu0 0.0
      %529 = vmatpush.msra.mxu0 0.0
      %530 = vmatpush.msra.mxu0 0.0
      %531 = vmatpush.msra.mxu0 0.0
      %532 = vmatpush.msra.mxu0 0.0
      %533 = vmatpush.msra.mxu0 0.0
      %534 = vmatpush.msra.mxu0 0.0
      %535 = vmatpush.msra.mxu0 0.0
      %536 = vmatpush.msra.mxu0 0.0
      %537 = vmatpush.msra.mxu0 0.0
      %538 = vmatpush.msra.mxu0 0.0
      %539 = vmatpush.msra.mxu0 0.0
      %540 = vmatpush.msra.mxu0 %v523
      %541 = vmatmul.f32.gmra.mxu0 %v520
      %v542 = vpop.f32.mrf.mxu0
      %v543 = vadd.f32 0.0, %v542
      %544 = vdwg.mxu0
      %v545 = vadd.f32 %v509, %v543
      %s546 = scalar_lea.vmem %s4, 32
      %v547 = vld [vmem:[%s546] sm:$0xff]
      %v549 = vsel %vm411, %v547, 0
      %v552 = vsel %vm415, %v358, 0
      %554 = vmatpush.msra.mxu0 0.0
      %555 = vmatpush.msra.mxu0 0.0
      %556 = vmatpush.msra.mxu0 0.0
      %557 = vmatpush.msra.mxu0 0.0
      %558 = vmatpush.msra.mxu0 0.0
      %559 = vmatpush.msra.mxu0 0.0
      %560 = vmatpush.msra.mxu0 0.0
      %561 = vmatpush.msra.mxu0 0.0
      %562 = vmatpush.msra.mxu0 0.0
      %563 = vmatpush.msra.mxu0 0.0
      %564 = vmatpush.msra.mxu0 0.0
      %565 = vmatpush.msra.mxu0 0.0
      %566 = vmatpush.msra.mxu0 0.0
      %567 = vmatpush.msra.mxu0 0.0
      %568 = vmatpush.msra.mxu0 0.0
      %569 = vmatpush.msra.mxu0 %v552
      %570 = vmatmul.f32.gmra.mxu0 %v549
      %v571 = vpop.f32.mrf.mxu0
      %v572 = vadd.f32 0.0, %v571
      %573 = vdwg.mxu0
      %v574 = vadd.f32 %v545, %v572
      %s575 = scalar_lea.vmem %s4, 40
      %v576 = vld [vmem:[%s575] sm:$0xff]
      %v578 = vsel %vm411, %v576, 0
      %v580 = vsel %vm415, %v365, 0
      %582 = vmatpush.msra.mxu0 0.0
      %583 = vmatpush.msra.mxu0 0.0
      %584 = vmatpush.msra.mxu0 0.0
      %585 = vmatpush.msra.mxu0 0.0
      %586 = vmatpush.msra.mxu0 0.0
      %587 = vmatpush.msra.mxu0 0.0
      %588 = vmatpush.msra.mxu0 0.0
      %589 = vmatpush.msra.mxu0 0.0
      %590 = vmatpush.msra.mxu0 0.0
      %591 = vmatpush.msra.mxu0 0.0
      %592 = vmatpush.msra.mxu0 0.0
      %593 = vmatpush.msra.mxu0 0.0
      %594 = vmatpush.msra.mxu0 0.0
      %595 = vmatpush.msra.mxu0 0.0
      %596 = vmatpush.msra.mxu0 0.0
      %597 = vmatpush.msra.mxu0 %v580
      %598 = vmatmul.f32.gmra.mxu0 %v578
      %v599 = vpop.f32.mrf.mxu0
      %v600 = vadd.f32 0.0, %v599
      %601 = vdwg.mxu0
      %v602 = vadd.f32 %v574, %v600
      %603 = vrot.lane.b32.xlu0 %v379, 1
      %v604 = vpop.permute.xlu0 %603
      %v606 = vsel %vm514, 0.0, %v604
      %v607 = vsel %vm395, 0.0, %v606
      %s608 = scalar_lea.vmem %s4, 48
      %v609 = vld [vmem:[%s608] sm:$0xff]
      %v611 = vsel %vm411, %v609, 0
      %v614 = vsel %vm415, %v607, 0
      %616 = vmatpush.msra.mxu0 0.0
      %617 = vmatpush.msra.mxu0 0.0
      %618 = vmatpush.msra.mxu0 0.0
      %619 = vmatpush.msra.mxu0 0.0
      %620 = vmatpush.msra.mxu0 0.0
      %621 = vmatpush.msra.mxu0 0.0
      %622 = vmatpush.msra.mxu0 0.0
      %623 = vmatpush.msra.mxu0 0.0
      %624 = vmatpush.msra.mxu0 0.0
      %625 = vmatpush.msra.mxu0 0.0
      %626 = vmatpush.msra.mxu0 0.0
      %627 = vmatpush.msra.mxu0 0.0
      %628 = vmatpush.msra.mxu0 0.0
      %629 = vmatpush.msra.mxu0 0.0
      %630 = vmatpush.msra.mxu0 0.0
      %631 = vmatpush.msra.mxu0 %v614
      %632 = vmatmul.f32.gmra.mxu0 %v611
      %v633 = vpop.f32.mrf.mxu0
      %v634 = vadd.f32 0.0, %v633
      %635 = vdwg.mxu0
      %v636 = vadd.f32 %v602, %v634
      %s637 = scalar_lea.vmem %s4, 56
      %v638 = vld [vmem:[%s637] sm:$0xff]
      %v640 = vsel %vm411, %v638, 0
      %v642 = vsel %vm415, %v372, 0
      %644 = vmatpush.msra.mxu0 0.0
      %645 = vmatpush.msra.mxu0 0.0
      %646 = vmatpush.msra.mxu0 0.0
      %647 = vmatpush.msra.mxu0 0.0
      %648 = vmatpush.msra.mxu0 0.0
      %649 = vmatpush.msra.mxu0 0.0
      %650 = vmatpush.msra.mxu0 0.0
      %651 = vmatpush.msra.mxu0 0.0
      %652 = vmatpush.msra.mxu0 0.0
      %653 = vmatpush.msra.mxu0 0.0
      %654 = vmatpush.msra.mxu0 0.0
      %655 = vmatpush.msra.mxu0 0.0
      %656 = vmatpush.msra.mxu0 0.0
      %657 = vmatpush.msra.mxu0 0.0
      %658 = vmatpush.msra.mxu0 0.0
      %659 = vmatpush.msra.mxu0 %v642
      %660 = vmatmul.f32.gmra.mxu0 %v640
      %v661 = vpop.f32.mrf.mxu0
      %v662 = vadd.f32 0.0, %v661
      %663 = vdwg.mxu0
      %v664 = vadd.f32 %v636, %v662
      %s665 = scalar_lea.vmem %s4, 64
      %v666 = vld [vmem:[%s665] sm:$0xff]
      %v668 = vsel %vm411, %v666, 0
      %v670 = vsel %vm415, %v379, 0
      %672 = vmatpush.msra.mxu0 0.0
      %673 = vmatpush.msra.mxu0 0.0
      %674 = vmatpush.msra.mxu0 0.0
      %675 = vmatpush.msra.mxu0 0.0
      %676 = vmatpush.msra.mxu0 0.0
      %677 = vmatpush.msra.mxu0 0.0
      %678 = vmatpush.msra.mxu0 0.0
      %679 = vmatpush.msra.mxu0 0.0
      %680 = vmatpush.msra.mxu0 0.0
      %681 = vmatpush.msra.mxu0 0.0
      %682 = vmatpush.msra.mxu0 0.0
      %683 = vmatpush.msra.mxu0 0.0
      %684 = vmatpush.msra.mxu0 0.0
      %685 = vmatpush.msra.mxu0 0.0
      %686 = vmatpush.msra.mxu0 0.0
      %687 = vmatpush.msra.mxu0 %v670
      %688 = vmatmul.f32.gmra.mxu0 %v668
      %v689 = vpop.f32.mrf.mxu0
      %v690 = vadd.f32 0.0, %v689
      %691 = vdwg.mxu0
      %v692 = vadd.f32 %v664, %v690
      %s693 = scalar_lea.vmem %s4, 72
      %v694 = vld [vmem:[%s693] sm:$0xff]
      %v696 = vsel %vm411, %v694, 0
      %v699 = vsel %vm415, %v298, 0
      %701 = vmatpush.msra.mxu0 0.0
      %702 = vmatpush.msra.mxu0 0.0
      %703 = vmatpush.msra.mxu0 0.0
      %704 = vmatpush.msra.mxu0 0.0
      %705 = vmatpush.msra.mxu0 0.0
      %706 = vmatpush.msra.mxu0 0.0
      %707 = vmatpush.msra.mxu0 0.0
      %708 = vmatpush.msra.mxu0 0.0
      %709 = vmatpush.msra.mxu0 0.0
      %710 = vmatpush.msra.mxu0 0.0
      %711 = vmatpush.msra.mxu0 0.0
      %712 = vmatpush.msra.mxu0 0.0
      %713 = vmatpush.msra.mxu0 0.0
      %714 = vmatpush.msra.mxu0 0.0
      %715 = vmatpush.msra.mxu0 0.0
      %716 = vmatpush.msra.mxu0 %v699
      %717 = vmatmul.f32.gmra.mxu0 %v696
      %v718 = vpop.f32.mrf.mxu0
      %v719 = vadd.f32 0.0, %v718
      %720 = vdwg.mxu0
      %v721 = vadd.f32 %v692, %v719
      %vm722 = vcmask 523264
      %723 = vst.msk [vmem:[%s297] sm:$0xff] %vm722, %v721
      %p724 = scmp.lt.s32.totalorder %s17, 1
      %s725 = scalar_select %p724, %s17, 1
      %s726 = smul.addr %s725, 8
      %s727 = scalar_lea.vmem %s6, %s726
      // Predicated region
      $region45: #{stride_block_forward.1} parent=43 // pred_check
        %p728 = pneg %p181
      $region46: #{stride_block_forward.1} parent=43 // pred_check_branch
        %730 = sbr.rel (%p728) target = $region48
      $region47: #{stride_block_forward.1} parent=43 // pred_region
        _
      $region48: #{stride_block_forward.1} parent=43 // pred_fallthru
        _
    $region44: #{stride_block_forward.1} parent=5 // pred_fallthru
      _
    %p731 = scmp.le.s32.totalorder 2, %s12
    // Predicated region
    $region49: #{stride_block_forward.1} parent=5 // pred_check
      %p732 = pneg %p731
    $region50: #{stride_block_forward.1} parent=5 // pred_check_branch
      %734 = sbr.rel (%p732) target = $region52
    $region51: #{stride_block_forward.1} parent=5 // pred_region
      %s735 = ssub.s32 %s12, 2
      // Predicated region
      $region53: #{stride_block_forward.1} parent=51 // pred_check
        %p736 = pneg %p187
      $region54: #{stride_block_forward.1} parent=51 // pred_check_branch
        %738 = sbr.rel (%p736) target = $region56
      $region55: #{stride_block_forward.1} parent=51 // pred_region
        %p739 = scmp.lt.s32.totalorder %s18, 1
        %s740 = scalar_select %p739, %s18, 1
        %s741 = smul.addr %s740, 8
        %s742 = scalar_lea.vmem %s6, %s741
      $region56: #{stride_block_forward.1} parent=51 // pred_fallthru
        _
    $region52: #{stride_block_forward.1} parent=5 // pred_fallthru
      _
  $region6: #{stride_block_forward.1} parent=0 // loop_footer
    %s16 = sadd.s32 1, %s12
  $region7: #{stride_block_forward.1} parent=0 // loop_footer_branch
    %11 = sbr.rel target = $region3
  $region8: #{stride_block_forward.1} parent=0 // loop_exit
    _

</llo_original>
